<compile_context>
chip_gen: v5e
topology: v5e:2x2
jax: 0.10.0
libtpu: 0.0.40
codegen_flags: <defaults>
</compile_context>

<pallas_src>
import functools

import jax
import jax.numpy as jnp
from jax.experimental import pallas as pl
from jax.experimental.pallas import tpu as pltpu

_LANE = 128


# ----------------------------------------------------------------------------
# Pallas kernel: per-(image, N-tile) partial sums of the focal-teacher loss.
# ----------------------------------------------------------------------------
def _ft_loss_kernel(t_cls_ref, s_cls_ref, t_bbox_ref, s_bbox_ref,
                    t_cent_ref, s_cent_ref, out_ref,
                    cls_acc, reg_acc, qua_acc, pos_acc,
                    *, n_valid, tile_n):
    n_idx = pl.program_id(1)

    @pl.when(n_idx == 0)
    def _init():
        cls_acc[...] = jnp.zeros_like(cls_acc)
        reg_acc[...] = jnp.zeros_like(reg_acc)
        qua_acc[...] = jnp.zeros_like(qua_acc)
        pos_acc[...] = jnp.zeros_like(pos_acc)

    # Lane mask for points past the true N (concat zero-tail and, for partial
    # edge blocks, stale VMEM contents).
    col = jax.lax.broadcasted_iota(jnp.int32, (1, tile_n), 1)
    valid = (n_idx * tile_n + col) < n_valid              # (1, tile_n) bool
    validf = valid.astype(jnp.float32)

    def load(ref):
        # (1, rows, tile_n) block -> (rows, tile_n) f32, garbage lanes zeroed
        # so downstream exp/log stay finite.  With zeroed inputs the cls/reg/
        # quality terms are exactly 0, so only pos_factor needs validf below.
        x = ref[0].astype(jnp.float32)
        return jnp.where(valid, x, 0.0)

    t_cls = load(t_cls_ref)      # (C, tile_n)
    s_cls = load(s_cls_ref)      # (C, tile_n)
    t_bbox = load(t_bbox_ref)    # (5, tile_n)
    s_bbox = load(s_bbox_ref)    # (5, tile_n)
    t_cent = load(t_cent_ref)    # (1, tile_n)
    s_cent = load(s_cent_ref)    # (1, tile_n)

    t_sig = jax.nn.sigmoid(t_cls)
    s_sig = jax.nn.sigmoid(s_cls)
    max_vals = jnp.max(t_sig, axis=0, keepdims=True)       # (1, tile_n)

    t_cent_sig = jax.nn.sigmoid(t_cent)                     # (1, tile_n)
    s_cent_sig = jax.nn.sigmoid(s_cent)                     # (1, tile_n)

    # pos_factor = max(sigmoid(t_cls)) * sigmoid(t_centerness)
    pos_acc[...] += max_vals * t_cent_sig * validf

    # --- classification: pt^2 * BCE(sigmoid(s), sigmoid(t)) ------------------
    # Exact PyTorch F.binary_cross_entropy semantics (each log clamped >= -100).
    pt = jnp.abs(s_sig - t_sig)
    bce = -(t_sig * jnp.maximum(jnp.log(s_sig), -100.0)
            + (1.0 - t_sig) * jnp.maximum(jnp.log(1.0 - s_sig), -100.0))
    cls_acc[...] += jnp.sum(pt * pt * bce, axis=0, keepdims=True)

    # --- regression: focal-style term on SmoothL1 (beta=1, reduction='none') --
    d = s_bbox - t_bbox
    ad = jnp.abs(d)
    sl1 = jnp.where(ad < 1.0, 0.5 * d * d, ad - 0.5)        # (5, tile_n)
    reg_prob = jnp.exp(-2.0 * jnp.sum(sl1, axis=0, keepdims=True))
    ptr = max_vals * (1.0 - reg_prob)
    reg_acc[...] += -(ptr * ptr) * jnp.log(1.0 - ptr + 1e-12)

    # --- quality / centerness -------------------------------------------------
    ptc = max_vals * jnp.abs(s_cent_sig - t_cent_sig)
    qua_acc[...] += -(ptc * ptc) * jnp.log(1.0 - ptc + 1e-12)

    # Finalize once per image: cross-lane reduce + pack 4 scalars into lanes.
    @pl.when(n_idx == pl.num_programs(1) - 1)
    def _finalize():
        lane = jax.lax.broadcasted_iota(jnp.int32, (1, _LANE), 1)
        out = (jnp.where(lane == 0, jnp.sum(cls_acc[...]), 0.0)
               + jnp.where(lane == 1, jnp.sum(reg_acc[...]), 0.0)
               + jnp.where(lane == 2, jnp.sum(qua_acc[...]), 0.0)
               + jnp.where(lane == 3, jnp.sum(pos_acc[...]), 0.0))
        out_ref[0] = out


def _ft_loss_sums(t_cls, s_cls, t_bbox, s_bbox, t_cent, s_cent, *,
                  n_valid, tile_n=8192):
    """Returns (B, 4) array of [cls_sum, reg_sum, qua_sum, pos_factor_sum]."""
    B, C, n_pad = t_cls.shape
    assert n_pad % _LANE == 0, "convert_shape must pad N to a multiple of 128"
    tile_n = max(_LANE, min(int(tile_n), n_pad))
    tile_n -= tile_n % _LANE
    n_tiles = pl.cdiv(n_pad, tile_n)

    cls_spec = pl.BlockSpec((1, C, tile_n), lambda b, n: (b, 0, n))
    bbox_spec = pl.BlockSpec((1, 5, tile_n), lambda b, n: (b, 0, n))
    cent_spec = pl.BlockSpec((1, 1, tile_n), lambda b, n: (b, 0, n))
    out_spec = pl.BlockSpec((1, 1, _LANE), lambda b, n: (b, 0, 0))

    kernel = functools.partial(_ft_loss_kernel, n_valid=n_valid, tile_n=tile_n)
    out = pl.pallas_call(
        kernel,
        out_shape=jax.ShapeDtypeStruct((B, 1, _LANE), jnp.float32),
        grid_spec=pltpu.PrefetchScalarGridSpec(
            num_scalar_prefetch=0,
            grid=(B, n_tiles),
            in_specs=[cls_spec, cls_spec, bbox_spec, bbox_spec,
                      cent_spec, cent_spec],
            out_specs=out_spec,
            scratch_shapes=[pltpu.VMEM((1, tile_n), jnp.float32)
                            for _ in range(4)],
        ),
        compiler_params=pltpu.CompilerParams(
            dimension_semantics=("parallel", "arbitrary"),
            vmem_limit_bytes=32 << 20),
    )(t_cls, s_cls, t_bbox, s_bbox, t_cent, s_cent)
    return out[:, 0, :4]


# ----------------------------------------------------------------------------
# Glue: channel-major convert_shape (no transposes, padding folded into concat).
# ----------------------------------------------------------------------------
def convert_shape_channel_major(logits, cls_channels, dtype):
    """NCHW per-level lists -> (B, C, N_pad), (B, 5, N_pad), (B, 1, N_pad), N."""
    cls_scores, bbox_preds, angle_preds, centernesses = logits
    assert len(cls_scores) == len(bbox_preds) == len(angle_preds) == len(centernesses)
    B = cls_scores[0].shape[0]
    n = sum(int(x.shape[2]) * int(x.shape[3]) for x in cls_scores)
    pad = (-n) % _LANE

    def tail(c):
        return [] if pad == 0 else [jnp.zeros((B, c, pad), dtype)]

    cls = jnp.concatenate(
        [x.astype(dtype).reshape(B, cls_channels, -1) for x in cls_scores]
        + tail(cls_channels), axis=2)
    bbox = jnp.concatenate(
        [jnp.concatenate([x, y], axis=1).astype(dtype).reshape(B, 5, -1)
         for x, y in zip(bbox_preds, angle_preds)] + tail(5), axis=2)
    cent = jnp.concatenate(
        [x.astype(dtype).reshape(B, 1, -1) for x in centernesses] + tail(1),
        axis=2)
    return cls, bbox, cent, n


def rotated_ft_loss(teacher_logits, student_logits, cls_channels=16,
                    tile_n=8192, input_dtype=jnp.bfloat16):
    # NOTE: student_labels / iter_count / class_names / ratio are unused by the
    # PyTorch forward's math, so they are omitted here.
    t_cls, t_bbox, t_cent, n = convert_shape_channel_major(
        teacher_logits, cls_channels, input_dtype)
    s_cls, s_bbox, s_cent, _ = convert_shape_channel_major(
        student_logits, cls_channels, input_dtype)

    sums = _ft_loss_sums(t_cls, s_cls, t_bbox, s_bbox, t_cent, s_cent,
                         n_valid=n, tile_n=tile_n)

    pos_factor_sum = sums[:, 3]
    loss_cls = jnp.mean(sums[:, 0] / pos_factor_sum)
    loss_bbox = jnp.mean(sums[:, 1] / pos_factor_sum)
    loss_centerness = jnp.mean(sums[:, 2] / pos_factor_sum)
    return dict(loss_cls=loss_cls, loss_bbox=loss_bbox,
                loss_centerness=loss_centerness)


# ----------------------------------------------------------------------------
# Pure-JAX reference (mirrors the PyTorch forward, NHWC-style convert_shape,
# explicit -100 log clamp of F.binary_cross_entropy).
# ----------------------------------------------------------------------------
def convert_shape_ref(logits, cls_channels):
    cls_scores, bbox_preds, angle_preds, centernesses = logits
    B = cls_scores[0].shape[0]
    cls = jnp.concatenate(
        [x.transpose(0, 2, 3, 1).reshape(B, -1, cls_channels)
         for x in cls_scores], axis=1)
    bbox = jnp.concatenate(
        [jnp.concatenate([x, y], axis=1).transpose(0, 2, 3, 1).reshape(B, -1, 5)
         for x, y in zip(bbox_preds, angle_preds)], axis=1)
    cent = jnp.concatenate(
        [x.transpose(0, 2, 3, 1).reshape(B, -1) for x in centernesses], axis=1)
    return cls, bbox, cent


def rotated_ft_loss_ref(teacher_logits, student_logits, cls_channels=16):
    t_cls, t_bbox, t_cent = convert_shape_ref(teacher_logits, cls_channels)
    s_cls, s_bbox, s_cent = convert_shape_ref(student_logits, cls_channels)

    t_sig = jax.nn.sigmoid(t_cls)
    s_sig = jax.nn.sigmoid(s_cls)
    max_vals = jnp.max(t_sig, axis=-1)                       # (B, N)
    pos_factor = max_vals * jax.nn.sigmoid(t_cent)
    pf_sum = jnp.sum(pos_factor, axis=1)                     # (B,)

    pt = jnp.abs(s_sig - t_sig)
    bce = -(t_sig * jnp.maximum(jnp.log(s_sig), -100.0)
            + (1.0 - t_sig) * jnp.maximum(jnp.log(1.0 - s_sig), -100.0))
    loss_cls = jnp.mean(jnp.sum(pt ** 2 * bce, axis=(1, 2)) / pf_sum)

    d = s_bbox - t_bbox
    sl1 = jnp.where(jnp.abs(d) < 1.0, 0.5 * d * d, jnp.abs(d) - 0.5)
    reg_prob = jnp.exp(-2.0 * jnp.sum(sl1, axis=-1))
    ptr = max_vals * (1.0 - reg_prob)
    loss_bbox = jnp.mean(
        jnp.sum(-(ptr ** 2) * jnp.log(1.0 - ptr + 1e-12), axis=1) / pf_sum)

    ptc = max_vals * jnp.abs(jax.nn.sigmoid(s_cent) - jax.nn.sigmoid(t_cent))
    loss_cent = jnp.mean(
        jnp.sum(-(ptc ** 2) * jnp.log(1.0 - ptc + 1e-12), axis=1) / pf_sum)
    return dict(loss_cls=loss_cls, loss_bbox=loss_bbox,
                loss_centerness=loss_cent)


if __name__ == "__main__":
    key = jax.random.PRNGKey(0)
    B = 2
    cls_channels = 16
    spatials = [16, 8]  # two FPN levels -> N = 256 + 64 = 320 points

    def make_logits(key):
        keys = jax.random.split(key, 4 * len(spatials))
        cls_scores, bbox_preds, angle_preds, centernesses = [], [], [], []
        i = 0
        for s in spatials:
            cls_scores.append(
                jax.random.normal(keys[i], (B, cls_channels, s, s), jnp.float32)); i += 1
            bbox_preds.append(
                jax.random.normal(keys[i], (B, 4, s, s), jnp.float32)); i += 1
            angle_preds.append(
                jax.random.normal(keys[i], (B, 1, s, s), jnp.float32)); i += 1
            centernesses.append(
                jax.random.normal(keys[i], (B, 1, s, s), jnp.float32)); i += 1
        return (cls_scores, bbox_preds, angle_preds, centernesses)

    k_t, k_s = jax.random.split(key)
    teacher_logits = make_logits(k_t)
    student_logits = make_logits(k_s)

    ref_f32 = rotated_ft_loss_ref(teacher_logits, student_logits, cls_channels)
    names = ("loss_cls", "loss_bbox", "loss_centerness")

    # --- Test 1: f32 inputs, TILE_N=128 -> 3 exact tiles; exercises multi-tile
    #             accumulation + masking of the concat zero tail (N=320 -> 384).
    losses = rotated_ft_loss(teacher_logits, student_logits, cls_channels,
                             tile_n=128, input_dtype=jnp.float32)
    losses = jax.tree_util.tree_map(jax.block_until_ready, losses)
    for name in names:
        assert jnp.allclose(losses[name], ref_f32[name], rtol=1e-3, atol=1e-5), (
            "f32/tile128", name, float(losses[name]), float(ref_f32[name]))

    # --- Test 2: f32 inputs, TILE_N=256 -> last tile is a partial edge block;
    #             exercises the in-kernel stale-VMEM / tail masking path.
    losses = rotated_ft_loss(teacher_logits, student_logits, cls_channels,
                             tile_n=256, input_dtype=jnp.float32)
    losses = jax.tree_util.tree_map(jax.block_until_ready, losses)
    for name in names:
        assert jnp.allclose(losses[name], ref_f32[name], rtol=1e-3, atol=1e-5), (
            "f32/tile256", name, float(losses[name]), float(ref_f32[name]))

    # --- Test 3: default bf16 inputs, default tile size; compare against the
    #             reference evaluated on identically bf16-rounded logits.
    losses_bf16 = rotated_ft_loss(teacher_logits, student_logits, cls_channels)
    losses_bf16 = jax.tree_util.tree_map(jax.block_until_ready, losses_bf16)
    round_bf16 = lambda x: x.astype(jnp.bfloat16).astype(jnp.float32)
    teacher_bf16 = jax.tree_util.tree_map(round_bf16, teacher_logits)
    student_bf16 = jax.tree_util.tree_map(round_bf16, student_logits)
    ref_bf16 = rotated_ft_loss_ref(teacher_bf16, student_bf16, cls_channels)
    for name in names:
        assert jnp.allclose(losses_bf16[name], ref_bf16[name],
                            rtol=5e-3, atol=1e-5), (
            "bf16", name, float(losses_bf16[name]), float(ref_bf16[name]))

    print("KERNEL_OK")
</pallas_src>

<mosaic_0001>
module attributes {stable_mosaic.version = 11 : i64} {
  func.func @_ft_loss_kernel(%arg0: i32, %arg1: i32, %arg2: memref<1x16x128xf32, #tpu.memory_space<vmem>>, %arg3: memref<1x16x128xf32, #tpu.memory_space<vmem>>, %arg4: memref<1x5x128xf32, #tpu.memory_space<vmem>>, %arg5: memref<1x5x128xf32, #tpu.memory_space<vmem>>, %arg6: memref<1x1x128xf32, #tpu.memory_space<vmem>>, %arg7: memref<1x1x128xf32, #tpu.memory_space<vmem>>, %arg8: memref<1x1x128xf32, #tpu.memory_space<vmem>>, %arg9: memref<1x128xf32, #tpu.memory_space<vmem>>, %arg10: memref<1x128xf32, #tpu.memory_space<vmem>>, %arg11: memref<1x128xf32, #tpu.memory_space<vmem>>, %arg12: memref<1x128xf32, #tpu.memory_space<vmem>>) attributes {dimension_semantics = [#tpu.dimension_semantics<parallel>, #tpu.dimension_semantics<arbitrary>], iteration_bounds = array<i64: 2, 3>, scalar_prefetch = 0 : i64, scratch_operands = 4 : i64, tpu.core_type = #tpu.core_type<tc>, window_params = [{transform_indices = @transform_0, window_bounds = array<i64: 1, 16, 128>}, {transform_indices = @transform_1, window_bounds = array<i64: 1, 16, 128>}, {transform_indices = @transform_2, window_bounds = array<i64: 1, 5, 128>}, {transform_indices = @transform_3, window_bounds = array<i64: 1, 5, 128>}, {transform_indices = @transform_4, window_bounds = array<i64: 1, 1, 128>}, {transform_indices = @transform_5, window_bounds = array<i64: 1, 1, 128>}, {transform_indices = @transform_6, window_bounds = array<i64: 1, 1, 128>}]} {
    %c0_i32 = arith.constant 0 : i32
    %0 = arith.cmpi eq, %arg1, %c0_i32 : i32
    %1 = arith.extui %0 : i1 to i32
    %c0_i32_0 = arith.constant 0 : i32
    %2 = arith.cmpi ne, %1, %c0_i32_0 : i32
    scf.if %2 {
      %cst_63 = arith.constant 0.000000e+00 : f32
      %142 = vector.broadcast %cst_63 : f32 to vector<1x128xf32>
      %c0_64 = arith.constant 0 : index
      %c0_65 = arith.constant 0 : index
      %143 = vector.load %arg9[%c0_64, %c0_65] : memref<1x128xf32, #tpu.memory_space<vmem>>, vector<1x128xf32>
      tpu.vector_store %arg9[%c0_64, %c0_65], %142 {strides = array<i32>} : memref<1x128xf32, #tpu.memory_space<vmem>>, vector<1x128xf32>,
      %cst_66 = arith.constant 0.000000e+00 : f32
      %144 = vector.broadcast %cst_66 : f32 to vector<1x128xf32>
      %c0_67 = arith.constant 0 : index
      %c0_68 = arith.constant 0 : index
      %145 = vector.load %arg10[%c0_67, %c0_68] : memref<1x128xf32, #tpu.memory_space<vmem>>, vector<1x128xf32>
      tpu.vector_store %arg10[%c0_67, %c0_68], %144 {strides = array<i32>} : memref<1x128xf32, #tpu.memory_space<vmem>>, vector<1x128xf32>,
      %cst_69 = arith.constant 0.000000e+00 : f32
      %146 = vector.broadcast %cst_69 : f32 to vector<1x128xf32>
      %c0_70 = arith.constant 0 : index
      %c0_71 = arith.constant 0 : index
      %147 = vector.load %arg11[%c0_70, %c0_71] : memref<1x128xf32, #tpu.memory_space<vmem>>, vector<1x128xf32>
      tpu.vector_store %arg11[%c0_70, %c0_71], %146 {strides = array<i32>} : memref<1x128xf32, #tpu.memory_space<vmem>>, vector<1x128xf32>,
      %cst_72 = arith.constant 0.000000e+00 : f32
      %148 = vector.broadcast %cst_72 : f32 to vector<1x128xf32>
      %c0_73 = arith.constant 0 : index
      %c0_74 = arith.constant 0 : index
      %149 = vector.load %arg12[%c0_73, %c0_74] : memref<1x128xf32, #tpu.memory_space<vmem>>, vector<1x128xf32>
      tpu.vector_store %arg12[%c0_73, %c0_74], %148 {strides = array<i32>} : memref<1x128xf32, #tpu.memory_space<vmem>>, vector<1x128xf32>,
    } else {
    }
    %3 = tpu.iota {dimensions = array<i32: 1>} : vector<1x128xi32>
    %c128_i32 = arith.constant 128 : i32
    %4 = arith.muli %arg1, %c128_i32 : i32
    %5 = vector.broadcast %4 : i32 to vector<1x128xi32>
    %6 = arith.addi %5, %3 : vector<1x128xi32>
    %c320_i32 = arith.constant 320 : i32
    %7 = vector.broadcast %c320_i32 : i32 to vector<1x128xi32>
    %8 = arith.cmpi slt, %6, %7 : vector<1x128xi32>
    %9 = arith.extui %8 : vector<1x128xi1> to vector<1x128xi32>
    %10 = arith.sitofp %9 : vector<1x128xi32> to vector<1x128xf32>
    %c0 = arith.constant 0 : index
    %c0_1 = arith.constant 0 : index
    %c0_2 = arith.constant 0 : index
    %11 = vector.load %arg2[%c0, %c0_1, %c0_2] : memref<1x16x128xf32, #tpu.memory_space<vmem>>, vector<1x16x128xf32>
    %12 = vector.shape_cast %11 : vector<1x16x128xf32> to vector<16x128xf32>
    %cst = arith.constant 0.000000e+00 : f32
    %13 = vector.shape_cast %8 : vector<1x128xi1> to vector<1x128xi1>
    %14 = vector.broadcast %13 : vector<1x128xi1> to vector<16x128xi1>
    %15 = vector.broadcast %cst : f32 to vector<16x128xf32>
    %16 = arith.select %14, %12, %15 : vector<16x128xi1>, vector<16x128xf32>
    %c0_3 = arith.constant 0 : index
    %c0_4 = arith.constant 0 : index
    %c0_5 = arith.constant 0 : index
    %17 = vector.load %arg3[%c0_3, %c0_4, %c0_5] : memref<1x16x128xf32, #tpu.memory_space<vmem>>, vector<1x16x128xf32>
    %18 = vector.shape_cast %17 : vector<1x16x128xf32> to vector<16x128xf32>
    %cst_6 = arith.constant 0.000000e+00 : f32
    %19 = vector.shape_cast %8 : vector<1x128xi1> to vector<1x128xi1>
    %20 = vector.broadcast %19 : vector<1x128xi1> to vector<16x128xi1>
    %21 = vector.broadcast %cst_6 : f32 to vector<16x128xf32>
    %22 = arith.select %20, %18, %21 : vector<16x128xi1>, vector<16x128xf32>
    %c0_7 = arith.constant 0 : index
    %c0_8 = arith.constant 0 : index
    %c0_9 = arith.constant 0 : index
    %23 = vector.load %arg4[%c0_7, %c0_8, %c0_9] : memref<1x5x128xf32, #tpu.memory_space<vmem>>, vector<1x5x128xf32>
    %24 = vector.shape_cast %23 : vector<1x5x128xf32> to vector<5x128xf32>
    %cst_10 = arith.constant 0.000000e+00 : f32
    %25 = vector.shape_cast %8 : vector<1x128xi1> to vector<1x128xi1>
    %26 = vector.broadcast %25 : vector<1x128xi1> to vector<5x128xi1>
    %27 = vector.broadcast %cst_10 : f32 to vector<5x128xf32>
    %28 = arith.select %26, %24, %27 : vector<5x128xi1>, vector<5x128xf32>
    %c0_11 = arith.constant 0 : index
    %c0_12 = arith.constant 0 : index
    %c0_13 = arith.constant 0 : index
    %29 = vector.load %arg5[%c0_11, %c0_12, %c0_13] : memref<1x5x128xf32, #tpu.memory_space<vmem>>, vector<1x5x128xf32>
    %30 = vector.shape_cast %29 : vector<1x5x128xf32> to vector<5x128xf32>
    %cst_14 = arith.constant 0.000000e+00 : f32
    %31 = vector.shape_cast %8 : vector<1x128xi1> to vector<1x128xi1>
    %32 = vector.broadcast %31 : vector<1x128xi1> to vector<5x128xi1>
    %33 = vector.broadcast %cst_14 : f32 to vector<5x128xf32>
    %34 = arith.select %32, %30, %33 : vector<5x128xi1>, vector<5x128xf32>
    %c0_15 = arith.constant 0 : index
    %c0_16 = arith.constant 0 : index
    %c0_17 = arith.constant 0 : index
    %35 = vector.load %arg6[%c0_15, %c0_16, %c0_17] : memref<1x1x128xf32, #tpu.memory_space<vmem>>, vector<1x1x128xf32>
    %36 = vector.shape_cast %35 : vector<1x1x128xf32> to vector<1x128xf32>
    %cst_18 = arith.constant 0.000000e+00 : f32
    %37 = vector.broadcast %cst_18 : f32 to vector<1x128xf32>
    %38 = arith.select %8, %36, %37 : vector<1x128xi1>, vector<1x128xf32>
    %c0_19 = arith.constant 0 : index
    %c0_20 = arith.constant 0 : index
    %c0_21 = arith.constant 0 : index
    %39 = vector.load %arg7[%c0_19, %c0_20, %c0_21] : memref<1x1x128xf32, #tpu.memory_space<vmem>>, vector<1x1x128xf32>
    %40 = vector.shape_cast %39 : vector<1x1x128xf32> to vector<1x128xf32>
    %cst_22 = arith.constant 0.000000e+00 : f32
    %41 = vector.broadcast %cst_22 : f32 to vector<1x128xf32>
    %42 = arith.select %8, %40, %41 : vector<1x128xi1>, vector<1x128xf32>
    %43 = arith.negf %16 : vector<16x128xf32>
    %44 = math.exp %43 : vector<16x128xf32>
    %cst_23 = arith.constant 1.000000e+00 : f32
    %45 = vector.broadcast %cst_23 : f32 to vector<16x128xf32>
    %46 = arith.addf %45, %44 : vector<16x128xf32>
    %47 = arith.divf %45, %46 : vector<16x128xf32>
    %48 = arith.negf %22 : vector<16x128xf32>
    %49 = math.exp %48 : vector<16x128xf32>
    %cst_24 = arith.constant 1.000000e+00 : f32
    %50 = vector.broadcast %cst_24 : f32 to vector<16x128xf32>
    %51 = arith.addf %50, %49 : vector<16x128xf32>
    %52 = arith.divf %50, %51 : vector<16x128xf32>
    %cst_25 = arith.constant dense<0xFF800000> : vector<128xf32>
    %53 = vector.multi_reduction <maximumf>, %47, %cst_25 [0] : vector<16x128xf32> to vector<128xf32>
    %54 = vector.shape_cast %53 : vector<128xf32> to vector<1x128xf32>
    %55 = arith.negf %38 : vector<1x128xf32>
    %56 = math.exp %55 : vector<1x128xf32>
    %cst_26 = arith.constant 1.000000e+00 : f32
    %57 = vector.broadcast %cst_26 : f32 to vector<1x128xf32>
    %58 = arith.addf %57, %56 : vector<1x128xf32>
    %59 = arith.divf %57, %58 : vector<1x128xf32>
    %60 = arith.negf %42 : vector<1x128xf32>
    %61 = math.exp %60 : vector<1x128xf32>
    %cst_27 = arith.constant 1.000000e+00 : f32
    %62 = vector.broadcast %cst_27 : f32 to vector<1x128xf32>
    %63 = arith.addf %62, %61 : vector<1x128xf32>
    %64 = arith.divf %62, %63 : vector<1x128xf32>
    %c0_28 = arith.constant 0 : index
    %c0_29 = arith.constant 0 : index
    %65 = vector.load %arg12[%c0_28, %c0_29] : memref<1x128xf32, #tpu.memory_space<vmem>>, vector<1x128xf32>
    %66 = arith.mulf %54, %59 : vector<1x128xf32>
    %67 = arith.mulf %66, %10 : vector<1x128xf32>
    %68 = arith.addf %65, %67 : vector<1x128xf32>
    %c0_30 = arith.constant 0 : index
    %c0_31 = arith.constant 0 : index
    %69 = vector.load %arg12[%c0_30, %c0_31] : memref<1x128xf32, #tpu.memory_space<vmem>>, vector<1x128xf32>
    tpu.vector_store %arg12[%c0_30, %c0_31], %68 {strides = array<i32>} : memref<1x128xf32, #tpu.memory_space<vmem>>, vector<1x128xf32>,
    %70 = arith.subf %52, %47 : vector<16x128xf32>
    %71 = math.absf %70 : vector<16x128xf32>
    %72 = math.log %52 : vector<16x128xf32>
    %cst_32 = arith.constant -1.000000e+02 : f32
    %73 = vector.broadcast %cst_32 : f32 to vector<16x128xf32>
    %74 = arith.maximumf %72, %73 : vector<16x128xf32>
    %75 = arith.mulf %47, %74 : vector<16x128xf32>
    %cst_33 = arith.constant 1.000000e+00 : f32
    %76 = vector.broadcast %cst_33 : f32 to vector<16x128xf32>
    %77 = arith.subf %76, %47 : vector<16x128xf32>
    %cst_34 = arith.constant 1.000000e+00 : f32
    %78 = vector.broadcast %cst_34 : f32 to vector<16x128xf32>
    %79 = arith.subf %78, %52 : vector<16x128xf32>
    %80 = math.log %79 : vector<16x128xf32>
    %cst_35 = arith.constant -1.000000e+02 : f32
    %81 = vector.broadcast %cst_35 : f32 to vector<16x128xf32>
    %82 = arith.maximumf %80, %81 : vector<16x128xf32>
    %83 = arith.mulf %77, %82 : vector<16x128xf32>
    %84 = arith.addf %75, %83 : vector<16x128xf32>
    %cst_36 = arith.constant 0.000000e+00 : f32
    %85 = vector.broadcast %cst_36 : f32 to vector<16x128xf32>
    %86 = arith.subf %85, %84 : vector<16x128xf32>
    %c0_37 = arith.constant 0 : index
    %c0_38 = arith.constant 0 : index
    %87 = vector.load %arg9[%c0_37, %c0_38] : memref<1x128xf32, #tpu.memory_space<vmem>>, vector<1x128xf32>
    %88 = arith.mulf %71, %71 : vector<16x128xf32>
    %89 = arith.mulf %88, %86 : vector<16x128xf32>
    %cst_39 = arith.constant dense<0.000000e+00> : vector<128xf32>
    %90 = vector.multi_reduction <add>, %89, %cst_39 [0] : vector<16x128xf32> to vector<128xf32>
    %91 = vector.shape_cast %90 : vector<128xf32> to vector<1x128xf32>
    %92 = arith.addf %87, %91 : vector<1x128xf32>
    %c0_40 = arith.constant 0 : index
    %c0_41 = arith.constant 0 : index
    %93 = vector.load %arg9[%c0_40, %c0_41] : memref<1x128xf32, #tpu.memory_space<vmem>>, vector<1x128xf32>
    tpu.vector_store %arg9[%c0_40, %c0_41], %92 {strides = array<i32>} : memref<1x128xf32, #tpu.memory_space<vmem>>, vector<1x128xf32>,
    %94 = arith.subf %34, %28 : vector<5x128xf32>
    %95 = math.absf %94 : vector<5x128xf32>
    %cst_42 = arith.constant 1.000000e+00 : f32
    %96 = vector.broadcast %cst_42 : f32 to vector<5x128xf32>
    %97 = arith.cmpf olt, %95, %96 : vector<5x128xf32>
    %cst_43 = arith.constant 5.000000e-01 : f32
    %98 = vector.broadcast %cst_43 : f32 to vector<5x128xf32>
    %99 = arith.mulf %98, %94 : vector<5x128xf32>
    %100 = arith.mulf %99, %94 : vector<5x128xf32>
    %cst_44 = arith.constant 5.000000e-01 : f32
    %101 = vector.broadcast %cst_44 : f32 to vector<5x128xf32>
    %102 = arith.subf %95, %101 : vector<5x128xf32>
    %103 = arith.select %97, %100, %102 : vector<5x128xi1>, vector<5x128xf32>
    %cst_45 = arith.constant dense<0.000000e+00> : vector<128xf32>
    %104 = vector.multi_reduction <add>, %103, %cst_45 [0] : vector<5x128xf32> to vector<128xf32>
    %105 = vector.shape_cast %104 : vector<128xf32> to vector<1x128xf32>
    %cst_46 = arith.constant -2.000000e+00 : f32
    %106 = vector.broadcast %cst_46 : f32 to vector<1x128xf32>
    %107 = arith.mulf %106, %105 : vector<1x128xf32>
    %108 = math.exp %107 : vector<1x128xf32>
    %cst_47 = arith.constant 1.000000e+00 : f32
    %109 = vector.broadcast %cst_47 : f32 to vector<1x128xf32>
    %110 = arith.subf %109, %108 : vector<1x128xf32>
    %111 = arith.mulf %54, %110 : vector<1x128xf32>
    %c0_48 = arith.constant 0 : index
    %c0_49 = arith.constant 0 : index
    %112 = vector.load %arg10[%c0_48, %c0_49] : memref<1x128xf32, #tpu.memory_space<vmem>>, vector<1x128xf32>
    %113 = arith.mulf %111, %111 : vector<1x128xf32>
    %cst_50 = arith.constant 0.000000e+00 : f32
    %114 = vector.broadcast %cst_50 : f32 to vector<1x128xf32>
    %115 = arith.subf %114, %113 : vector<1x128xf32>
    %cst_51 = arith.constant 1.000000e+00 : f32
    %116 = vector.broadcast %cst_51 : f32 to vector<1x128xf32>
    %117 = arith.subf %116, %111 : vector<1x128xf32>
    %cst_52 = arith.constant 9.99999996E-13 : f32
    %118 = vector.broadcast %cst_52 : f32 to vector<1x128xf32>
    %119 = arith.addf %117, %118 : vector<1x128xf32>
    %120 = math.log %119 : vector<1x128xf32>
    %121 = arith.mulf %115, %120 : vector<1x128xf32>
    %122 = arith.addf %112, %121 : vector<1x128xf32>
    %c0_53 = arith.constant 0 : index
    %c0_54 = arith.constant 0 : index
    %123 = vector.load %arg10[%c0_53, %c0_54] : memref<1x128xf32, #tpu.memory_space<vmem>>, vector<1x128xf32>
    tpu.vector_store %arg10[%c0_53, %c0_54], %122 {strides = array<i32>} : memref<1x128xf32, #tpu.memory_space<vmem>>, vector<1x128xf32>,
    %124 = arith.subf %64, %59 : vector<1x128xf32>
    %125 = math.absf %124 : vector<1x128xf32>
    %126 = arith.mulf %54, %125 : vector<1x128xf32>
    %c0_55 = arith.constant 0 : index
    %c0_56 = arith.constant 0 : index
    %127 = vector.load %arg11[%c0_55, %c0_56] : memref<1x128xf32, #tpu.memory_space<vmem>>, vector<1x128xf32>
    %128 = arith.mulf %126, %126 : vector<1x128xf32>
    %cst_57 = arith.constant 0.000000e+00 : f32
    %129 = vector.broadcast %cst_57 : f32 to vector<1x128xf32>
    %130 = arith.subf %129, %128 : vector<1x128xf32>
    %cst_58 = arith.constant 1.000000e+00 : f32
    %131 = vector.broadcast %cst_58 : f32 to vector<1x128xf32>
    %132 = arith.subf %131, %126 : vector<1x128xf32>
    %cst_59 = arith.constant 9.99999996E-13 : f32
    %133 = vector.broadcast %cst_59 : f32 to vector<1x128xf32>
    %134 = arith.addf %132, %133 : vector<1x128xf32>
    %135 = math.log %134 : vector<1x128xf32>
    %136 = arith.mulf %130, %135 : vector<1x128xf32>
    %137 = arith.addf %127, %136 : vector<1x128xf32>
    %c0_60 = arith.constant 0 : index
    %c0_61 = arith.constant 0 : index
    %138 = vector.load %arg11[%c0_60, %c0_61] : memref<1x128xf32, #tpu.memory_space<vmem>>, vector<1x128xf32>
    tpu.vector_store %arg11[%c0_60, %c0_61], %137 {strides = array<i32>} : memref<1x128xf32, #tpu.memory_space<vmem>>, vector<1x128xf32>,
    %c2_i32 = arith.constant 2 : i32
    %139 = arith.cmpi eq, %arg1, %c2_i32 : i32
    %140 = arith.extui %139 : i1 to i32
    %c0_i32_62 = arith.constant 0 : i32
    %141 = arith.cmpi ne, %140, %c0_i32_62 : i32
    scf.if %141 {
      %142 = tpu.iota {dimensions = array<i32: 1>} : vector<1x128xi32>
      %c0_i32_63 = arith.constant 0 : i32
      %143 = vector.broadcast %c0_i32_63 : i32 to vector<1x128xi32>
      %144 = arith.cmpi eq, %142, %143 : vector<1x128xi32>
      %c0_64 = arith.constant 0 : index
      %c0_65 = arith.constant 0 : index
      %145 = vector.load %arg9[%c0_64, %c0_65] : memref<1x128xf32, #tpu.memory_space<vmem>>, vector<1x128xf32>
      %146 = vector.shape_cast %145 : vector<1x128xf32> to vector<1x1x128xf32>
      %cst_66 = arith.constant dense<0.000000e+00> : vector<1xf32>
      %147 = vector.multi_reduction <add>, %146, %cst_66 [1, 2] : vector<1x1x128xf32> to vector<1xf32>
      %148 = vector.shape_cast %147 : vector<1xf32> to vector<1x1x1xf32>
      %149 = vector.extract %148[0, 0, 0] : f32 from vector<1x1x1xf32>
      %cst_67 = arith.constant 0.000000e+00 : f32
      %150 = vector.broadcast %149 : f32 to vector<1x128xf32>
      %151 = vector.broadcast %cst_67 : f32 to vector<1x128xf32>
      %152 = arith.select %144, %150, %151 : vector<1x128xi1>, vector<1x128xf32>
      %c1_i32 = arith.constant 1 : i32
      %153 = vector.broadcast %c1_i32 : i32 to vector<1x128xi32>
      %154 = arith.cmpi eq, %142, %153 : vector<1x128xi32>
      %c0_68 = arith.constant 0 : index
      %c0_69 = arith.constant 0 : index
      %155 = vector.load %arg10[%c0_68, %c0_69] : memref<1x128xf32, #tpu.memory_space<vmem>>, vector<1x128xf32>
      %156 = vector.shape_cast %155 : vector<1x128xf32> to vector<1x1x128xf32>
      %cst_70 = arith.constant dense<0.000000e+00> : vector<1xf32>
      %157 = vector.multi_reduction <add>, %156, %cst_70 [1, 2] : vector<1x1x128xf32> to vector<1xf32>
      %158 = vector.shape_cast %157 : vector<1xf32> to vector<1x1x1xf32>
      %159 = vector.extract %158[0, 0, 0] : f32 from vector<1x1x1xf32>
      %cst_71 = arith.constant 0.000000e+00 : f32
      %160 = vector.broadcast %159 : f32 to vector<1x128xf32>
      %161 = vector.broadcast %cst_71 : f32 to vector<1x128xf32>
      %162 = arith.select %154, %160, %161 : vector<1x128xi1>, vector<1x128xf32>
      %163 = arith.addf %152, %162 : vector<1x128xf32>
      %c2_i32_72 = arith.constant 2 : i32
      %164 = vector.broadcast %c2_i32_72 : i32 to vector<1x128xi32>
      %165 = arith.cmpi eq, %142, %164 : vector<1x128xi32>
      %c0_73 = arith.constant 0 : index
      %c0_74 = arith.constant 0 : index
      %166 = vector.load %arg11[%c0_73, %c0_74] : memref<1x128xf32, #tpu.memory_space<vmem>>, vector<1x128xf32>
      %167 = vector.shape_cast %166 : vector<1x128xf32> to vector<1x1x128xf32>
      %cst_75 = arith.constant dense<0.000000e+00> : vector<1xf32>
      %168 = vector.multi_reduction <add>, %167, %cst_75 [1, 2] : vector<1x1x128xf32> to vector<1xf32>
      %169 = vector.shape_cast %168 : vector<1xf32> to vector<1x1x1xf32>
      %170 = vector.extract %169[0, 0, 0] : f32 from vector<1x1x1xf32>
      %cst_76 = arith.constant 0.000000e+00 : f32
      %171 = vector.broadcast %170 : f32 to vector<1x128xf32>
      %172 = vector.broadcast %cst_76 : f32 to vector<1x128xf32>
      %173 = arith.select %165, %171, %172 : vector<1x128xi1>, vector<1x128xf32>
      %174 = arith.addf %163, %173 : vector<1x128xf32>
      %c3_i32 = arith.constant 3 : i32
      %175 = vector.broadcast %c3_i32 : i32 to vector<1x128xi32>
      %176 = arith.cmpi eq, %142, %175 : vector<1x128xi32>
      %c0_77 = arith.constant 0 : index
      %c0_78 = arith.constant 0 : index
      %177 = vector.load %arg12[%c0_77, %c0_78] : memref<1x128xf32, #tpu.memory_space<vmem>>, vector<1x128xf32>
      %178 = vector.shape_cast %177 : vector<1x128xf32> to vector<1x1x128xf32>
      %cst_79 = arith.constant dense<0.000000e+00> : vector<1xf32>
      %179 = vector.multi_reduction <add>, %178, %cst_79 [1, 2] : vector<1x1x128xf32> to vector<1xf32>
      %180 = vector.shape_cast %179 : vector<1xf32> to vector<1x1x1xf32>
      %181 = vector.extract %180[0, 0, 0] : f32 from vector<1x1x1xf32>
      %cst_80 = arith.constant 0.000000e+00 : f32
      %182 = vector.broadcast %181 : f32 to vector<1x128xf32>
      %183 = vector.broadcast %cst_80 : f32 to vector<1x128xf32>
      %184 = arith.select %176, %182, %183 : vector<1x128xi1>, vector<1x128xf32>
      %185 = arith.addf %174, %184 : vector<1x128xf32>
      %c0_81 = arith.constant 0 : index
      %c0_82 = arith.constant 0 : index
      %c0_83 = arith.constant 0 : index
      %186 = vector.load %arg8[%c0_81, %c0_82, %c0_83] : memref<1x1x128xf32, #tpu.memory_space<vmem>>, vector<1x1x128xf32>
      %187 = vector.shape_cast %186 : vector<1x1x128xf32> to vector<1x128xf32>
      %188 = vector.shape_cast %185 : vector<1x128xf32> to vector<1x1x128xf32>
      tpu.vector_store %arg8[%c0_81, %c0_82, %c0_83], %188 {strides = array<i32>} : memref<1x1x128xf32, #tpu.memory_space<vmem>>, vector<1x1x128xf32>,
    } else {
    }
    return
  }
  func.func @transform_0(%arg0: i32, %arg1: i32) -> (i32, i32, i32) {
    %c0_i32 = arith.constant 0 : i32
    %c0_i32_0 = arith.constant 0 : i32
    return %arg0, %c0_i32, %arg1 : i32, i32, i32
  }
  func.func @transform_1(%arg0: i32, %arg1: i32) -> (i32, i32, i32) {
    %c0_i32 = arith.constant 0 : i32
    %c0_i32_0 = arith.constant 0 : i32
    return %arg0, %c0_i32, %arg1 : i32, i32, i32
  }
  func.func @transform_2(%arg0: i32, %arg1: i32) -> (i32, i32, i32) {
    %c0_i32 = arith.constant 0 : i32
    %c0_i32_0 = arith.constant 0 : i32
    return %arg0, %c0_i32, %arg1 : i32, i32, i32
  }
  func.func @transform_3(%arg0: i32, %arg1: i32) -> (i32, i32, i32) {
    %c0_i32 = arith.constant 0 : i32
    %c0_i32_0 = arith.constant 0 : i32
    return %arg0, %c0_i32, %arg1 : i32, i32, i32
  }
  func.func @transform_4(%arg0: i32, %arg1: i32) -> (i32, i32, i32) {
    %c0_i32 = arith.constant 0 : i32
    %c0_i32_0 = arith.constant 0 : i32
    return %arg0, %c0_i32, %arg1 : i32, i32, i32
  }
  func.func @transform_5(%arg0: i32, %arg1: i32) -> (i32, i32, i32) {
    %c0_i32 = arith.constant 0 : i32
    %c0_i32_0 = arith.constant 0 : i32
    return %arg0, %c0_i32, %arg1 : i32, i32, i32
  }
  func.func @transform_6(%arg0: i32, %arg1: i32) -> (i32, i32, i32) {
    %c0_i32 = arith.constant 0 : i32
    %c0_i32_0 = arith.constant 0 : i32
    %c0_i32_1 = arith.constant 0 : i32
    return %arg0, %c0_i32, %c0_i32_0 : i32, i32, i32
  }
}

</mosaic_0001>

<llo_original>
// kernel: tpu_custom_call.1
$region0: #{tpu_custom_call.1}
  #allocation0 [shape = 'u32[]', space=smem, size = 0x4, offset = 0x4, fixed_abs, tag = 'smem constant byte address 0x4 - core index']
  #allocation1 [shape = 'u32[72,128]{1,0:T(1,128)}', space=vmem, size = 0x9000, scoped, tag = 'internal scratch']
  #allocation2 [shape = 'f32[1,128]{1,0:T(1,128)}', space=vmem, size = 0x200, scoped, tag = 'scratch operand']
  #allocation3 [shape = 'f32[1,128]{1,0:T(1,128)}', space=vmem, size = 0x200, scoped, tag = 'scratch operand']
  #allocation4 [shape = 'f32[1,128]{1,0:T(1,128)}', space=vmem, size = 0x200, scoped, tag = 'scratch operand']
  #allocation5 [shape = 'f32[1,128]{1,0:T(1,128)}', space=vmem, size = 0x200, scoped, tag = 'scratch operand']
  %s0 = inlined_call_operand.vmem [shape: f32[2,16,384], index: 0, kind: input, shape index: {}]
  %s1 = inlined_call_operand.hbm [shape: f32[2,16,384], index: 1, kind: input, shape index: {}]
  %s2 = inlined_call_operand.vmem [shape: f32[2,5,384], index: 2, kind: input, shape index: {}]
  %s3 = inlined_call_operand.vmem [shape: f32[2,5,384], index: 3, kind: input, shape index: {}]
  %s4 = inlined_call_operand.vmem [shape: f32[2,1,384], index: 4, kind: input, shape index: {}]
  %s5 = inlined_call_operand.vmem [shape: f32[2,1,384], index: 5, kind: input, shape index: {}]
  %s6 = inlined_call_operand.hbm [shape: f32[2,1,128], index: 6, kind: output, shape index: {}]
  %s7 = sld [smem:[#allocation0]]
  $region107: #{tpu_custom_call.1} parent=0
    _
  %s9 = ssub.s32 1, %s7
  %s10 = scalar_select 0, %s9, %s7
  $region1: #{tpu_custom_call.1} parent=0
    #allocation6 [shape = 'u8[16384]{0}', space=vmem, size = 0x4000, scoped, tag = 'input window, operand 0']
    #allocation7 [shape = 'u8[16384]{0}', space=vmem, size = 0x4000, scoped, tag = 'input window, operand 1']
    #allocation8 [shape = 's32[2]{0}', space=sflag, size = 0x8, scoped, tag = 'scoped memory for tpu_custom_call.1']
    #allocation9 [shape = 's32[2]{0}', space=sflag, size = 0x8, scoped, tag = 'scoped memory for tpu_custom_call.1']
    #allocation10 [shape = 'u8[1024]{0}', space=vmem, size = 0x400, scoped, tag = 'output window, operand 0']
    %11 = vsyncpa [#allocation8], 0
    %s12 = scalar_lea.sflag [#allocation8], 1
    %13 = vsyncpa %s12, 0
    %14 = vsyncpa [#allocation9], 0
    %s15 = scalar_lea.sflag [#allocation9], 1
    %16 = vsyncpa %s15, 0
    loop: start=0, step=1, limit=8
    $region2: #{tpu_custom_call.1} parent=1 // loop_pre_header
      _
    $region3: #{tpu_custom_call.1} parent=1 // loop_header
      %s18 = sphi 0, %s22
      %p19 = scmp.ge.s32.totalorder %s18, 8
      %s25 = sphi 0, %s37
      %s26 = sphi 0, %s33
      %s27 = sphi 0, %s25
      %s28 = sphi 0, %s26
      %s29 = sphi 0, %s27
      %s30 = sphi 0, %s28
      %s42 = sphi 0, %s44
      %s45 = sphi 0, %s42
      %s46 = sphi 0, %s45
      %s62 = sphi 0, %s46
      %s70 = sphi 0, %s72
      %s73 = sphi 0, %s70
      %s74 = sphi 0, %s73
      %s90 = sphi 0, %s74
      %s98 = sphi 0, %s100
      %s101 = sphi 0, %s98
      %s102 = sphi 0, %s101
      %s118 = sphi 0, %s102
      %s126 = sphi 0, %s128
      %s129 = sphi 0, %s126
      %s130 = sphi 0, %s129
      %s146 = sphi 0, %s130
      %s154 = sphi 0, %s156
      %s157 = sphi 0, %s154
      %s158 = sphi 0, %s157
      %s174 = sphi 0, %s158
      %s182 = sphi 0, %s184
      %s185 = sphi 0, %s182
      %s186 = sphi 0, %s185
      %s202 = sphi 0, %s186
      %s208 = sphi 0, %s210
      %s211 = sphi 0, %s208
      %s212 = sphi 0, %s211
      %s228 = sphi 0, %s212
    $region4: #{tpu_custom_call.1} parent=1 // loop_header_branch
      %21 = sbr.rel (%p19) target = $region8
    $region5: #{tpu_custom_call.1} parent=1 // loop_body
      %s23 = ssub.s32 %s18, 1
      %s24 = ssub.s32 %s18, 2
      %s31 = sadd.s32 1, %s26
      %p32 = scmp.ge.s32.totalorder %s31, 3
      %s33 = scalar_select %p32, 0, %s31
      %s34 = sadd.s32 1, %s25
      %s35 = scalar_select %p32, %s34, %s25
      %p36 = scmp.ge.s32.totalorder %s35, 2
      %s37 = scalar_select %p36, 0, %s35
      %s38 = ssub.s32 %s25, %s37
      %s39 = ssub.s32 %s26, %s33
      %s40 = sor.u32 %s38, %s39
      %p41 = scmp.eq.s32.totalorder %s40, 0
      %s43 = sadd.s32 %s42, 1
      %s44 = scalar_select %p41, %s42, %s43
      %p47 = pneg %p41
      %p48 = scmp.eq.s32.totalorder %s18, 5
      %p49 = por %p47, %p48
      %p50 = scmp.ne.s32.totalorder %s42, %s45
      %p51 = scmp.eq.s32.totalorder %s18, 0
      %p52 = por %p50, %p51
      %p53 = scmp.ne.s32.totalorder %s42, %s45
      %p54 = scmp.eq.s32.totalorder %s23, 5
      %p55 = por %p53, %p54
      %p56 = scmp.ne.s32.totalorder %s45, %s46
      %p57 = scmp.eq.s32.totalorder %s23, 0
      %p58 = por %p56, %p57
      %p59 = scmp.ne.s32.totalorder %s45, %s46
      %p60 = scmp.eq.s32.totalorder %s24, 5
      %p61 = por %p59, %p60
      %p63 = scmp.ne.s32.totalorder %s46, %s62
      %p64 = scmp.eq.s32.totalorder %s24, 0
      %p65 = por %p63, %p64
      %s66 = ssub.s32 %s25, %s37
      %s67 = ssub.s32 %s26, %s33
      %s68 = sor.u32 %s66, %s67
      %p69 = scmp.eq.s32.totalorder %s68, 0
      %s71 = sadd.s32 %s70, 1
      %s72 = scalar_select %p69, %s70, %s71
      %p75 = pneg %p69
      %p76 = scmp.eq.s32.totalorder %s18, 5
      %p77 = por %p75, %p76
      %p78 = scmp.ne.s32.totalorder %s70, %s73
      %p79 = scmp.eq.s32.totalorder %s18, 0
      %p80 = por %p78, %p79
      %p81 = scmp.ne.s32.totalorder %s70, %s73
      %p82 = scmp.eq.s32.totalorder %s23, 5
      %p83 = por %p81, %p82
      %p84 = scmp.ne.s32.totalorder %s73, %s74
      %p85 = scmp.eq.s32.totalorder %s23, 0
      %p86 = por %p84, %p85
      %p87 = scmp.ne.s32.totalorder %s73, %s74
      %p88 = scmp.eq.s32.totalorder %s24, 5
      %p89 = por %p87, %p88
      %p91 = scmp.ne.s32.totalorder %s74, %s90
      %p92 = scmp.eq.s32.totalorder %s24, 0
      %p93 = por %p91, %p92
      %s94 = ssub.s32 %s25, %s37
      %s95 = ssub.s32 %s26, %s33
      %s96 = sor.u32 %s94, %s95
      %p97 = scmp.eq.s32.totalorder %s96, 0
      %s99 = sadd.s32 %s98, 1
      %s100 = scalar_select %p97, %s98, %s99
      %p103 = pneg %p97
      %p104 = scmp.eq.s32.totalorder %s18, 5
      %p105 = por %p103, %p104
      %p106 = scmp.ne.s32.totalorder %s98, %s101
      %p107 = scmp.eq.s32.totalorder %s18, 0
      %p108 = por %p106, %p107
      %p109 = scmp.ne.s32.totalorder %s98, %s101
      %p110 = scmp.eq.s32.totalorder %s23, 5
      %p111 = por %p109, %p110
      %p112 = scmp.ne.s32.totalorder %s101, %s102
      %p113 = scmp.eq.s32.totalorder %s23, 0
      %p114 = por %p112, %p113
      %p115 = scmp.ne.s32.totalorder %s101, %s102
      %p116 = scmp.eq.s32.totalorder %s24, 5
      %p117 = por %p115, %p116
      %p119 = scmp.ne.s32.totalorder %s102, %s118
      %p120 = scmp.eq.s32.totalorder %s24, 0
      %p121 = por %p119, %p120
      %s122 = ssub.s32 %s25, %s37
      %s123 = ssub.s32 %s26, %s33
      %s124 = sor.u32 %s122, %s123
      %p125 = scmp.eq.s32.totalorder %s124, 0
      %s127 = sadd.s32 %s126, 1
      %s128 = scalar_select %p125, %s126, %s127
      %p131 = pneg %p125
      %p132 = scmp.eq.s32.totalorder %s18, 5
      %p133 = por %p131, %p132
      %p134 = scmp.ne.s32.totalorder %s126, %s129
      %p135 = scmp.eq.s32.totalorder %s18, 0
      %p136 = por %p134, %p135
      %p137 = scmp.ne.s32.totalorder %s126, %s129
      %p138 = scmp.eq.s32.totalorder %s23, 5
      %p139 = por %p137, %p138
      %p140 = scmp.ne.s32.totalorder %s129, %s130
      %p141 = scmp.eq.s32.totalorder %s23, 0
      %p142 = por %p140, %p141
      %p143 = scmp.ne.s32.totalorder %s129, %s130
      %p144 = scmp.eq.s32.totalorder %s24, 5
      %p145 = por %p143, %p144
      %p147 = scmp.ne.s32.totalorder %s130, %s146
      %p148 = scmp.eq.s32.totalorder %s24, 0
      %p149 = por %p147, %p148
      %s150 = ssub.s32 %s25, %s37
      %s151 = ssub.s32 %s26, %s33
      %s152 = sor.u32 %s150, %s151
      %p153 = scmp.eq.s32.totalorder %s152, 0
      %s155 = sadd.s32 %s154, 1
      %s156 = scalar_select %p153, %s154, %s155
      %p159 = pneg %p153
      %p160 = scmp.eq.s32.totalorder %s18, 5
      %p161 = por %p159, %p160
      %p162 = scmp.ne.s32.totalorder %s154, %s157
      %p163 = scmp.eq.s32.totalorder %s18, 0
      %p164 = por %p162, %p163
      %p165 = scmp.ne.s32.totalorder %s154, %s157
      %p166 = scmp.eq.s32.totalorder %s23, 5
      %p167 = por %p165, %p166
      %p168 = scmp.ne.s32.totalorder %s157, %s158
      %p169 = scmp.eq.s32.totalorder %s23, 0
      %p170 = por %p168, %p169
      %p171 = scmp.ne.s32.totalorder %s157, %s158
      %p172 = scmp.eq.s32.totalorder %s24, 5
      %p173 = por %p171, %p172
      %p175 = scmp.ne.s32.totalorder %s158, %s174
      %p176 = scmp.eq.s32.totalorder %s24, 0
      %p177 = por %p175, %p176
      %s178 = ssub.s32 %s25, %s37
      %s179 = ssub.s32 %s26, %s33
      %s180 = sor.u32 %s178, %s179
      %p181 = scmp.eq.s32.totalorder %s180, 0
      %s183 = sadd.s32 %s182, 1
      %s184 = scalar_select %p181, %s182, %s183
      %p187 = pneg %p181
      %p188 = scmp.eq.s32.totalorder %s18, 5
      %p189 = por %p187, %p188
      %p190 = scmp.ne.s32.totalorder %s182, %s185
      %p191 = scmp.eq.s32.totalorder %s18, 0
      %p192 = por %p190, %p191
      %p193 = scmp.ne.s32.totalorder %s182, %s185
      %p194 = scmp.eq.s32.totalorder %s23, 5
      %p195 = por %p193, %p194
      %p196 = scmp.ne.s32.totalorder %s185, %s186
      %p197 = scmp.eq.s32.totalorder %s23, 0
      %p198 = por %p196, %p197
      %p199 = scmp.ne.s32.totalorder %s185, %s186
      %p200 = scmp.eq.s32.totalorder %s24, 5
      %p201 = por %p199, %p200
      %p203 = scmp.ne.s32.totalorder %s186, %s202
      %p204 = scmp.eq.s32.totalorder %s24, 0
      %p205 = por %p203, %p204
      %s206 = ssub.s32 %s25, %s37
      %p207 = scmp.eq.s32.totalorder %s206, 0
      %s209 = sadd.s32 %s208, 1
      %s210 = scalar_select %p207, %s208, %s209
      %p213 = pneg %p207
      %p214 = scmp.eq.s32.totalorder %s18, 5
      %p215 = por %p213, %p214
      %p216 = scmp.ne.s32.totalorder %s208, %s211
      %p217 = scmp.eq.s32.totalorder %s18, 0
      %p218 = por %p216, %p217
      %p219 = scmp.ne.s32.totalorder %s208, %s211
      %p220 = scmp.eq.s32.totalorder %s23, 5
      %p221 = por %p219, %p220
      %p222 = scmp.ne.s32.totalorder %s211, %s212
      %p223 = scmp.eq.s32.totalorder %s23, 0
      %p224 = por %p222, %p223
      %p225 = scmp.ne.s32.totalorder %s211, %s212
      %p226 = scmp.eq.s32.totalorder %s24, 5
      %p227 = por %p225, %p226
      %p229 = scmp.ne.s32.totalorder %s212, %s228
      %p230 = scmp.eq.s32.totalorder %s24, 0
      %p231 = por %p229, %p230
      %p232 = scmp.le.s32.totalorder 1, %s18
      %p233 = scmp.lt.s32.totalorder %s18, 7
      %p234 = pnand %p232, %p233
      %p235 = pneg %p234
      // Predicated region
      $region9: #{tpu_custom_call.1} parent=5 // pred_check
        _
      $region10: #{tpu_custom_call.1} parent=5 // pred_check_branch
        %237 = sbr.rel (%p234) target = $region12
      $region11: #{tpu_custom_call.1} parent=5 // pred_region
        %s238 = ssub.s32 %s18, 1
      $region12: #{tpu_custom_call.1} parent=5 // pred_fallthru
        _
      %p239 = scmp.lt.s32.totalorder %s18, 6
      // Predicated region
      $region13: #{tpu_custom_call.1} parent=5 // pred_check
        %p240 = pneg %p239
      $region14: #{tpu_custom_call.1} parent=5 // pred_check_branch
        %242 = sbr.rel (%p240) target = $region16
      $region15: #{tpu_custom_call.1} parent=5 // pred_region
        // Predicated region
        $region17: #{tpu_custom_call.1} parent=15 // pred_check
          %p243 = pneg %p52
        $region18: #{tpu_custom_call.1} parent=15 // pred_check_branch
          %245 = sbr.rel (%p243) target = $region20
        $region19: #{tpu_custom_call.1} parent=15 // pred_region
          %s246 = sand.u32 %s42, 1
          %s247 = sand.u32 %s42, 1
          %s248 = smul.addr %s247, 16
          %s249 = scalar_lea.vmem [#allocation6], %s248
          %s250 = smul.addr %s25, 6
          %s251 = sadd.s32 %s26, %s250
          %s252 = smul.addr %s251, 8
          %s253 = scalar_lea.vmem %s0, %s252
          // Predicated region
          $region21: #{tpu_custom_call.1} parent=19 // pred_check
            _
          $region22: #{tpu_custom_call.1} parent=19 // pred_check_branch
            %255 = sbr.rel (0) target = $region24
          $region23: #{tpu_custom_call.1} parent=19 // pred_region
            // Predicated region
            $region25: #{tpu_custom_call.1} parent=23 // pred_check
              _
            $region26: #{tpu_custom_call.1} parent=23 // pred_check_branch
              %257 = sbr.rel (0) target = $region28
            $region27: #{tpu_custom_call.1} parent=23 // pred_region
              // Predicated region
              $region40: #{tpu_custom_call.1} parent=27 // pred_check
                _
              $region41: #{tpu_custom_call.1} parent=27 // pred_check_branch
                %275 = sbr.rel (0) target = $region43
              $region42: #{tpu_custom_call.1} parent=27 // pred_region
                loop: start=0, step=1, limit=1
                $region44: #{tpu_custom_call.1} parent=42 // loop_pre_header
                  _
                $region45: #{tpu_custom_call.1} parent=42 // loop_header
                  %s277 = sphi 0, %s281
                  %p278 = scmp.ge.s32.totalorder %s277, 1
                  %s282 = sphi %s253, %s253
                  %s283 = sphi %s249, %s249
                $region46: #{tpu_custom_call.1} parent=42 // loop_header_branch
                  %280 = sbr.rel (%p278) target = $region50
                $region47: #{tpu_custom_call.1} parent=42 // loop_body
                  %v284 = vld [vmem:[%s282] sm:$0xff]
                  %285 = vst [vmem:[%s283] sm:$0xff] %v284
                  %v286 = vld [vmem:[%s282 + $0x18] sm:$0xff]
                  %287 = vst [vmem:[%s283 + $0x8] sm:$0xff] %v286
                $region48: #{tpu_custom_call.1} parent=42 // loop_footer
                  %s281 = sadd.s32 1, %s277
                $region49: #{tpu_custom_call.1} parent=42 // loop_footer_branch
                  %276 = sbr.rel target = $region45
                $region50: #{tpu_custom_call.1} parent=42 // loop_exit
                  _
              $region43: #{tpu_custom_call.1} parent=27 // pred_fallthru
                _
              // Predicated region
              $region51: #{tpu_custom_call.1} parent=27 // pred_check
                _
              $region52: #{tpu_custom_call.1} parent=27 // pred_check_branch
                %289 = sbr.rel target = $region54
              $region53: #{tpu_custom_call.1} parent=27 // pred_region
                _
              $region54: #{tpu_custom_call.1} parent=27 // pred_fallthru
                _
            $region28: #{tpu_custom_call.1} parent=23 // pred_fallthru
              _
            // Predicated region
            $region29: #{tpu_custom_call.1} parent=23 // pred_check
              _
            $region30: #{tpu_custom_call.1} parent=23 // pred_check_branch
              %259 = sbr.rel target = $region32
            $region31: #{tpu_custom_call.1} parent=23 // pred_region
              %s261 = ssub.s32 256, 1
              loop: start=0, step=1, limit=1
              $region33: #{tpu_custom_call.1} parent=31 // loop_pre_header
                _
              $region34: #{tpu_custom_call.1} parent=31 // loop_header
                %s263 = sphi 0, %s267
                %p264 = scmp.ge.s32.totalorder %s263, 1
                %s268 = sphi %s253, %s253
                %s269 = sphi %s249, %s249
              $region35: #{tpu_custom_call.1} parent=31 // loop_header_branch
                %266 = sbr.rel (%p264) target = $region39
              $region36: #{tpu_custom_call.1} parent=31 // loop_body
                %v270 = vld [vmem:[%s268] sm:%s261]
                %271 = vst [vmem:[%s269] sm:%s261] %v270
                %v272 = vld [vmem:[%s268 + $0x18] sm:%s261]
                %273 = vst [vmem:[%s269 + $0x8] sm:%s261] %v272
              $region37: #{tpu_custom_call.1} parent=31 // loop_footer
                %s267 = sadd.s32 1, %s263
              $region38: #{tpu_custom_call.1} parent=31 // loop_footer_branch
                %262 = sbr.rel target = $region34
              $region39: #{tpu_custom_call.1} parent=31 // loop_exit
                _
            $region32: #{tpu_custom_call.1} parent=23 // pred_fallthru
              _
          $region24: #{tpu_custom_call.1} parent=19 // pred_fallthru
            _
          %290 = vnop
        $region20: #{tpu_custom_call.1} parent=15 // pred_fallthru
          _
        // Predicated region
        $region55: #{tpu_custom_call.1} parent=15 // pred_check
          %p291 = pneg %p80
        $region56: #{tpu_custom_call.1} parent=15 // pred_check_branch
          %293 = sbr.rel (%p291) target = $region58
        $region57: #{tpu_custom_call.1} parent=15 // pred_region
          %s294 = sand.u32 %s70, 1
          %s295 = scalar_lea.sflag [#allocation8], %s294
          %s296 = sand.u32 %s70, 1
          %s297 = smul.addr %s296, 16
          %s298 = scalar_lea.vmem [#allocation7], %s297
          %300 = vsyncadd %s295, 0
          %s301 = smul.addr %s25, 6
          %s302 = sadd.s32 %s26, %s301
          %s303 = smul.addr %s302, 8
          %s304 = scalar_lea.hbm %s1, %s303
          %s305 = sshll.u32 %s304, 4
          %s306 = int_to_ptr.hbm [resolvable:$true] %s305
          %s307 = sshll.u32 %s298, 4
          %s308 = int_to_ptr.vmem [resolvable:$true] %s307
          %313 = dma.hbm_to_vmem [thread:$0]  %s306, 256, %s308, %s295, 384, 128, 8
        $region58: #{tpu_custom_call.1} parent=15 // pred_fallthru
          _
        // Predicated region
        $region59: #{tpu_custom_call.1} parent=15 // pred_check
          %p314 = pneg %p108
        $region60: #{tpu_custom_call.1} parent=15 // pred_check_branch
          %316 = sbr.rel (%p314) target = $region62
        $region61: #{tpu_custom_call.1} parent=15 // pred_region
          %p317 = scmp.lt.s32.totalorder %s25, 1
          %s318 = scalar_select %p317, %s25, 1
          %p319 = scmp.lt.s32.totalorder %s26, 2
          %s320 = scalar_select %p319, %s26, 2
          %s321 = smul.addr %s318, 3
          %s322 = sadd.s32 %s320, %s321
          %s323 = smul.addr %s322, 8
          %s324 = scalar_lea.vmem %s2, %s323
        $region62: #{tpu_custom_call.1} parent=15 // pred_fallthru
          _
        // Predicated region
        $region63: #{tpu_custom_call.1} parent=15 // pred_check
          %p325 = pneg %p136
        $region64: #{tpu_custom_call.1} parent=15 // pred_check_branch
          %327 = sbr.rel (%p325) target = $region66
        $region65: #{tpu_custom_call.1} parent=15 // pred_region
          %p328 = scmp.lt.s32.totalorder %s25, 1
          %s329 = scalar_select %p328, %s25, 1
          %p330 = scmp.lt.s32.totalorder %s26, 2
          %s331 = scalar_select %p330, %s26, 2
          %s332 = smul.addr %s329, 3
          %s333 = sadd.s32 %s331, %s332
          %s334 = smul.addr %s333, 8
          %s335 = scalar_lea.vmem %s3, %s334
        $region66: #{tpu_custom_call.1} parent=15 // pred_fallthru
          _
        // Predicated region
        $region67: #{tpu_custom_call.1} parent=15 // pred_check
          %p336 = pneg %p164
        $region68: #{tpu_custom_call.1} parent=15 // pred_check_branch
          %338 = sbr.rel (%p336) target = $region70
        $region69: #{tpu_custom_call.1} parent=15 // pred_region
          %p339 = scmp.lt.s32.totalorder %s25, 1
          %s340 = scalar_select %p339, %s25, 1
          %p341 = scmp.lt.s32.totalorder %s26, 2
          %s342 = scalar_select %p341, %s26, 2
          %s343 = smul.addr %s340, 3
          %s344 = sadd.s32 %s342, %s343
          %s345 = scalar_lea.vmem %s4, %s344
        $region70: #{tpu_custom_call.1} parent=15 // pred_fallthru
          _
        // Predicated region
        $region71: #{tpu_custom_call.1} parent=15 // pred_check
          %p346 = pneg %p192
        $region72: #{tpu_custom_call.1} parent=15 // pred_check_branch
          %348 = sbr.rel (%p346) target = $region74
        $region73: #{tpu_custom_call.1} parent=15 // pred_region
          %p349 = scmp.lt.s32.totalorder %s25, 1
          %s350 = scalar_select %p349, %s25, 1
          %p351 = scmp.lt.s32.totalorder %s26, 2
          %s352 = scalar_select %p351, %s26, 2
          %s353 = smul.addr %s350, 3
          %s354 = sadd.s32 %s352, %s353
          %s355 = scalar_lea.vmem %s5, %s354
        $region74: #{tpu_custom_call.1} parent=15 // pred_fallthru
          _
      $region16: #{tpu_custom_call.1} parent=5 // pred_fallthru
        _
      %p356 = scmp.le.s32.totalorder 1, %s18
      %p357 = scmp.lt.s32.totalorder %s18, 7
      %p358 = pnand %p356, %p357
      %p359 = pneg %p358
      // Predicated region
      $region75: #{tpu_custom_call.1} parent=5 // pred_check
        _
      $region76: #{tpu_custom_call.1} parent=5 // pred_check_branch
        %361 = sbr.rel (%p358) target = $region78
      $region77: #{tpu_custom_call.1} parent=5 // pred_region
        %s362 = ssub.s32 %s18, 1
        %s363 = sand.u32 %s45, 1
        %s364 = sand.u32 %s45, 1
        %s365 = smul.addr %s364, 16
        %s366 = scalar_lea.vmem [#allocation6], %s365
        // Predicated region
        $region79: #{tpu_custom_call.1} parent=77 // pred_check
          %p367 = pneg %p58
        $region80: #{tpu_custom_call.1} parent=77 // pred_check_branch
          %369 = sbr.rel (%p367) target = $region82
        $region81: #{tpu_custom_call.1} parent=77 // pred_region
          _
        $region82: #{tpu_custom_call.1} parent=77 // pred_fallthru
          _
        %s370 = sand.u32 %s73, 1
        %s371 = scalar_lea.sflag [#allocation8], %s370
        %s372 = sand.u32 %s73, 1
        %s373 = smul.addr %s372, 16
        %s374 = scalar_lea.vmem [#allocation7], %s373
        // Predicated region
        $region83: #{tpu_custom_call.1} parent=77 // pred_check
          %p375 = pneg %p86
        $region84: #{tpu_custom_call.1} parent=77 // pred_check_branch
          %377 = sbr.rel (%p375) target = $region86
        $region85: #{tpu_custom_call.1} parent=77 // pred_region
          %379 = dma.done %s371, 256
        $region86: #{tpu_custom_call.1} parent=77 // pred_fallthru
          _
        %s380 = sand.u32 %s45, 1
        %s381 = sand.u32 %s45, 1
        %s382 = smul.addr %s381, 16
        %s383 = scalar_lea.vmem [#allocation6], %s382
        %p384 = pneg %p58
        %p385 = pneg %p55
        %s386 = sand.u32 %s73, 1
        %s387 = scalar_lea.sflag [#allocation8], %s386
        %s388 = sand.u32 %s73, 1
        %s389 = smul.addr %s388, 16
        %s390 = scalar_lea.vmem [#allocation7], %s389
        %p391 = pneg %p86
        %p392 = pneg %p83
        %p393 = scmp.lt.s32.totalorder %s27, 1
        %s394 = scalar_select %p393, %s27, 1
        %p395 = scmp.lt.s32.totalorder %s28, 2
        %s396 = scalar_select %p395, %s28, 2
        %s397 = smul.addr %s394, 3
        %s398 = sadd.s32 %s396, %s397
        %s399 = smul.addr %s398, 8
        %s400 = scalar_lea.vmem %s2, %s399
        %p401 = pneg %p114
        %p402 = pneg %p111
        %p403 = scmp.lt.s32.totalorder %s27, 1
        %s404 = scalar_select %p403, %s27, 1
        %p405 = scmp.lt.s32.totalorder %s28, 2
        %s406 = scalar_select %p405, %s28, 2
        %s407 = smul.addr %s404, 3
        %s408 = sadd.s32 %s406, %s407
        %s409 = smul.addr %s408, 8
        %s410 = scalar_lea.vmem %s3, %s409
        %p411 = pneg %p142
        %p412 = pneg %p139
        %p413 = scmp.lt.s32.totalorder %s27, 1
        %s414 = scalar_select %p413, %s27, 1
        %p415 = scmp.lt.s32.totalorder %s28, 2
        %s416 = scalar_select %p415, %s28, 2
        %s417 = smul.addr %s414, 3
        %s418 = sadd.s32 %s416, %s417
        %s419 = scalar_lea.vmem %s4, %s418
        %p420 = pneg %p170
        %p421 = pneg %p167
        %p422 = scmp.lt.s32.totalorder %s27, 1
        %s423 = scalar_select %p422, %s27, 1
        %p424 = scmp.lt.s32.totalorder %s28, 2
        %s425 = scalar_select %p424, %s28, 2
        %s426 = smul.addr %s423, 3
        %s427 = sadd.s32 %s425, %s426
        %s428 = scalar_lea.vmem %s5, %s427
        %p429 = pneg %p198
        %p430 = pneg %p195
        %p431 = pneg %p224
        %p432 = pneg %p221
        %s433 = sand.u32 %s211, 1
        %s434 = scalar_lea.sflag [#allocation9], %s433
        %s435 = sand.u32 %s211, 1
        %s436 = scalar_lea.vmem [#allocation10], %s435
        %p437 = scmp.lt.s32.totalorder %s27, 1
        %s438 = scalar_select %p437, %s27, 1
        %p439 = scmp.lt.s32.totalorder %s28, 2
        %s440 = scalar_select %p439, %s28, 2
        %s441 = smul.addr %s438, 3
        %s442 = sadd.s32 %s440, %s441
        %s443 = smul.addr %s442, 8
        %s444 = scalar_lea.vmem %s2, %s443
        %p445 = scmp.lt.s32.totalorder %s27, 1
        %s446 = scalar_select %p445, %s27, 1
        %p447 = scmp.lt.s32.totalorder %s28, 2
        %s448 = scalar_select %p447, %s28, 2
        %s449 = smul.addr %s446, 3
        %s450 = sadd.s32 %s448, %s449
        %s451 = smul.addr %s450, 8
        %s452 = scalar_lea.vmem %s3, %s451
        %p453 = scmp.lt.s32.totalorder %s27, 1
        %s454 = scalar_select %p453, %s27, 1
        %p455 = scmp.lt.s32.totalorder %s28, 2
        %s456 = scalar_select %p455, %s28, 2
        %s457 = smul.addr %s454, 3
        %s458 = sadd.s32 %s456, %s457
        %s459 = scalar_lea.vmem %s4, %s458
        %p460 = scmp.lt.s32.totalorder %s27, 1
        %s461 = scalar_select %p460, %s27, 1
        %p462 = scmp.lt.s32.totalorder %s28, 2
        %s463 = scalar_select %p462, %s28, 2
        %s464 = smul.addr %s461, 3
        %s465 = sadd.s32 %s463, %s464
        %s466 = scalar_lea.vmem %s5, %s465
        %p467 = scmp.eq.s32.totalorder %s28, 0
        // Predicated region
        $region87: #{tpu_custom_call.1} parent=77 // pred_check
          %p468 = pneg %p467
        $region88: #{tpu_custom_call.1} parent=77 // pred_check_branch
          %470 = sbr.rel (%p468) target = $region90
        $region89: #{tpu_custom_call.1} parent=77 // pred_region
          %471 = vst [vmem:[#allocation2] sm:$0x1] 0.0
          %472 = vst [vmem:[#allocation3] sm:$0x1] 0.0
          %473 = vst [vmem:[#allocation4] sm:$0x1] 0.0
          %474 = vst [vmem:[#allocation5] sm:$0x1] 0.0
        $region90: #{tpu_custom_call.1} parent=77 // pred_fallthru
          _
        %v475 = vlaneseq
        %v476 = vand.u32 %v475, 127
        %s477 = smul.u32 %s28, 128
        %v478 = vstv %s477
        %v479 = vadd.s32 %v478, %v476
        %vm480 = vcmp.lt.s32.totalorder %v479, 320
        %v481 = vsel %vm480, 1, 0
        %v482 = vcvt.s32.f32 %v481
        %v483 = vld [vmem:[%s366] sm:$0xff]
        %v484 = vld [vmem:[%s366 + $0x8] sm:$0xff]
        %vm485 = vcmp.eq.s32.totalorder %v481, 1
        %v486 = vsel %vm485, %v483, 0.0
        %v487 = vsel %vm485, %v484, 0.0
        %v488 = vld [vmem:[%s374] sm:$0xff]
        %v489 = vld [vmem:[%s374 + $0x8] sm:$0xff]
        %v490 = vsel %vm485, %v488, 0.0
        %v491 = vsel %vm485, %v489, 0.0
        %v492 = vld [vmem:[%s444] sm:$0x1f]
        %v493 = vsel %vm485, %v492, 0.0
        %v494 = vld [vmem:[%s452] sm:$0x1f]
        %v495 = vsel %vm485, %v494, 0.0
        %v496 = vld [vmem:[%s459] sm:$0x1]
        %v497 = vsel %vm480, %v496, 0.0
        %v498 = vld [vmem:[%s466] sm:$0x1]
        %v499 = vsel %vm480, %v498, 0.0
        %v500 = vxor.u32 %v486, 2147483648
        %v501 = vxor.u32 %v487, 2147483648
        %v502 = vmul.f32 %v500, 1.442695
        %v503 = vpow.pop %v502
        %v504 = vmul.f32 %v501, 1.442695
        %v505 = vpow.pop %v504
        %v506 = vadd.f32 %v503, 1.0
        %v507 = vadd.f32 %v505, 1.0
        %v508 = vrcp.pop %v506
        %v509 = vmul.f32 %v506, %v508
        %v510 = vsub.f32 1.0, %v509
        %v511 = vmul.f32 %v508, %v510
        %v512 = vadd.f32 %v508, %v511
        %vm513 = vweird.f32 %v506
        %vm514 = vweird.f32 %v508
        %vm515 = vmor %vm513, %vm514
        %v516 = vsel %vm515, %v508, %v512
        %v517 = vand.u32 2147483647, %v506
        %vm518 = vcmp.eq.f32.partialorder %v517, 8.507059e+37
        %v519 = vand.u32 %v506, 2147483648
        %v520 = vor.u32 1.1754944e-38, %v519
        %v521 = vsel %vm518, %v520, %v516
        %v522 = vmul.f32 1.0, %v521
        %v523 = vrcp.pop %v507
        %v524 = vmul.f32 %v507, %v523
        %v525 = vsub.f32 1.0, %v524
        %v526 = vmul.f32 %v523, %v525
        %v527 = vadd.f32 %v523, %v526
        %vm528 = vweird.f32 %v507
        %vm529 = vweird.f32 %v523
        %vm530 = vmor %vm528, %vm529
        %v531 = vsel %vm530, %v523, %v527
        %v532 = vand.u32 2147483647, %v507
        %vm533 = vcmp.eq.f32.partialorder %v532, 8.507059e+37
        %v534 = vand.u32 %v507, 2147483648
        %v535 = vor.u32 1.1754944e-38, %v534
        %v536 = vsel %vm533, %v535, %v531
        %v537 = vmul.f32 1.0, %v536
        %v538 = vxor.u32 %v490, 2147483648
        %v539 = vxor.u32 %v491, 2147483648
        %v540 = vmul.f32 %v538, 1.442695
        %v541 = vpow.pop %v540
        %v542 = vmul.f32 %v539, 1.442695
        %v543 = vpow.pop %v542
        %v544 = vadd.f32 %v541, 1.0
        %v545 = vadd.f32 %v543, 1.0
        %v546 = vrcp.pop %v544
        %v547 = vmul.f32 %v544, %v546
        %v548 = vsub.f32 1.0, %v547
        %v549 = vmul.f32 %v546, %v548
        %v550 = vadd.f32 %v546, %v549
        %vm551 = vweird.f32 %v544
        %vm552 = vweird.f32 %v546
        %vm553 = vmor %vm551, %vm552
        %v554 = vsel %vm553, %v546, %v550
        %v555 = vand.u32 2147483647, %v544
        %vm556 = vcmp.eq.f32.partialorder %v555, 8.507059e+37
        %v557 = vand.u32 %v544, 2147483648
        %v558 = vor.u32 1.1754944e-38, %v557
        %v559 = vsel %vm556, %v558, %v554
        %v560 = vmul.f32 1.0, %v559
        %v561 = vrcp.pop %v545
        %v562 = vmul.f32 %v545, %v561
        %v563 = vsub.f32 1.0, %v562
        %v564 = vmul.f32 %v561, %v563
        %v565 = vadd.f32 %v561, %v564
        %vm566 = vweird.f32 %v545
        %vm567 = vweird.f32 %v561
        %vm568 = vmor %vm566, %vm567
        %v569 = vsel %vm568, %v561, %v565
        %v570 = vand.u32 2147483647, %v545
        %vm571 = vcmp.eq.f32.partialorder %v570, 8.507059e+37
        %v572 = vand.u32 %v545, 2147483648
        %v573 = vor.u32 1.1754944e-38, %v572
        %v574 = vsel %vm571, %v573, %v569
        %v575 = vmul.f32 1.0, %v574
        %v576 = vmax.f32 %v522, %v537
        %v577 = vrot.slane %v576, 4
        %v578 = vmax.f32 %v576, %v577
        %v579 = vrot.slane %v578, 2
        %v580 = vmax.f32 %v578, %v579
        %v581 = vrot.slane %v580, 1
        %v582 = vmax.f32 %v580, %v581
        %v583 = vxor.u32 %v497, 2147483648
        %v584 = vmul.f32 %v583, 1.442695
        %v585 = vpow.pop %v584
        %v586 = vadd.f32 %v585, 1.0
        %v587 = vrcp.pop %v586
        %v588 = vmul.f32 %v586, %v587
        %v589 = vsub.f32 1.0, %v588
        %v590 = vmul.f32 %v587, %v589
        %v591 = vadd.f32 %v587, %v590
        %vm592 = vweird.f32 %v586
        %vm593 = vweird.f32 %v587
        %vm594 = vmor %vm592, %vm593
        %v595 = vsel %vm594, %v587, %v591
        %v596 = vand.u32 2147483647, %v586
        %vm597 = vcmp.eq.f32.partialorder %v596, 8.507059e+37
        %v598 = vand.u32 %v586, 2147483648
        %v599 = vor.u32 1.1754944e-38, %v598
        %v600 = vsel %vm597, %v599, %v595
        %v601 = vmul.f32 1.0, %v600
        %v602 = vxor.u32 %v499, 2147483648
        %v603 = vmul.f32 %v602, 1.442695
        %v604 = vpow.pop %v603
        %v605 = vadd.f32 %v604, 1.0
        %v606 = vrcp.pop %v605
        %v607 = vmul.f32 %v605, %v606
        %v608 = vsub.f32 1.0, %v607
        %v609 = vmul.f32 %v606, %v608
        %v610 = vadd.f32 %v606, %v609
        %vm611 = vweird.f32 %v605
        %vm612 = vweird.f32 %v606
        %vm613 = vmor %vm611, %vm612
        %v614 = vsel %vm613, %v606, %v610
        %v615 = vand.u32 2147483647, %v605
        %vm616 = vcmp.eq.f32.partialorder %v615, 8.507059e+37
        %v617 = vand.u32 %v605, 2147483648
        %v618 = vor.u32 1.1754944e-38, %v617
        %v619 = vsel %vm616, %v618, %v614
        %v620 = vmul.f32 1.0, %v619
        %v621 = vld [vmem:[#allocation5] sm:$0x1]
        %v622 = vmul.f32 %v582, %v601
        %v623 = vmul.f32 %v622, %v482
        %v624 = vadd.f32 %v621, %v623
        %625 = vst [vmem:[#allocation5] sm:$0x1] %v624
        %v626 = vsub.f32 %v560, %v522
        %v627 = vsub.f32 %v575, %v537
        %v628 = vand.u32 2147483647, %v626
        %v629 = vand.u32 2147483647, %v627
        %v630 = vlog2.pop %v560
        %v631 = vmul.f32 %v630, 0.6931472
        %v632 = vlog2.pop %v575
        %v633 = vmul.f32 %v632, 0.6931472
        %v634 = vmax.f32 %v631, -100.0
        %v635 = vmax.f32 %v633, -100.0
        %v636 = vmul.f32 %v522, %v634
        %v637 = vmul.f32 %v537, %v635
        %v638 = vsub.f32 1.0, %v522
        %v639 = vsub.f32 1.0, %v537
        %v640 = vsub.f32 1.0, %v560
        %v641 = vsub.f32 1.0, %v575
        %v642 = vlog2.pop %v640
        %v643 = vmul.f32 %v642, 0.6931472
        %v644 = vlog2.pop %v641
        %v645 = vmul.f32 %v644, 0.6931472
        %v646 = vmax.f32 %v643, -100.0
        %v647 = vmax.f32 %v645, -100.0
        %v648 = vmul.f32 %v638, %v646
        %v649 = vmul.f32 %v639, %v647
        %v650 = vadd.f32 %v636, %v648
        %v651 = vadd.f32 %v637, %v649
        %v652 = vsub.f32 0.0, %v650
        %v653 = vsub.f32 0.0, %v651
        %v654 = vld [vmem:[#allocation2] sm:$0x1]
        %v655 = vmul.f32 %v628, %v628
        %v656 = vmul.f32 %v629, %v629
        %v657 = vmul.f32 %v655, %v652
        %v658 = vmul.f32 %v656, %v653
        %v659 = vadd.f32 %v657, %v658
        %v660 = vrot.slane %v659, 4
        %v661 = vadd.f32 %v659, %v660
        %v662 = vrot.slane %v661, 2
        %v663 = vadd.f32 %v661, %v662
        %v664 = vrot.slane %v663, 1
        %v665 = vadd.f32 %v663, %v664
        %v666 = vadd.f32 %v654, %v665
        %667 = vst [vmem:[#allocation2] sm:$0x1] %v666
        %v668 = vsub.f32 %v495, %v493
        %v669 = vand.u32 2147483647, %v668
        %vm670 = vcmp.lt.f32.partialorder %v669, 1.0
        %v671 = vmul.f32 %v668, 0.5
        %v672 = vmul.f32 %v671, %v668
        %v673 = vsub.f32 %v669, 0.5
        %v674 = vsel %vm670, %v672, %v673
        %vm675 = vcmask 1044480
        %v676 = vsel %vm675, %v674, 0.0
        %v677 = vrot.slane %v676, 4
        %v678 = vadd.f32 %v676, %v677
        %v679 = vrot.slane %v678, 2
        %v680 = vadd.f32 %v678, %v679
        %v681 = vrot.slane %v680, 1
        %v682 = vadd.f32 %v680, %v681
        %v683 = vmul.f32 %v682, -2.0
        %v684 = vmul.f32 %v683, 1.442695
        %v685 = vpow.pop %v684
        %v686 = vsub.f32 1.0, %v685
        %v687 = vmul.f32 %v582, %v686
        %v688 = vld [vmem:[#allocation3] sm:$0x1]
        %v689 = vmul.f32 %v687, %v687
        %v690 = vsub.f32 0.0, %v689
        %v691 = vsub.f32 1.0, %v687
        %v692 = vadd.f32 %v691, 1e-12
        %v693 = vlog2.pop %v692
        %v694 = vmul.f32 %v693, 0.6931472
        %v695 = vmul.f32 %v690, %v694
        %v696 = vadd.f32 %v688, %v695
        %697 = vst [vmem:[#allocation3] sm:$0x1] %v696
        %v698 = vsub.f32 %v620, %v601
        %v699 = vand.u32 2147483647, %v698
        %v700 = vmul.f32 %v582, %v699
        %v701 = vld [vmem:[#allocation4] sm:$0x1]
        %v702 = vmul.f32 %v700, %v700
        %v703 = vsub.f32 0.0, %v702
        %v704 = vsub.f32 1.0, %v700
        %v705 = vadd.f32 %v704, 1e-12
        %v706 = vlog2.pop %v705
        %v707 = vmul.f32 %v706, 0.6931472
        %v708 = vmul.f32 %v703, %v707
        %v709 = vadd.f32 %v701, %v708
        %710 = vst [vmem:[#allocation4] sm:$0x1] %v709
        %p711 = scmp.eq.s32.totalorder %s28, 2
        // Predicated region
        $region91: #{tpu_custom_call.1} parent=77 // pred_check
          %p712 = pneg %p711
        $region92: #{tpu_custom_call.1} parent=77 // pred_check_branch
          %714 = sbr.rel (%p712) target = $region94
        $region93: #{tpu_custom_call.1} parent=77 // pred_region
          %vm715 = vcmp.eq.s32.totalorder %v476, 0
          %v716 = vld [vmem:[#allocation2] sm:$0x1]
          %vm717 = vcmask 1040384
          %v718 = vsel %vm717, %v716, 0.0
          %719 = vadd.xlane.f32.xlu0 %v718
          %v720 = vpop.xlane.xlu0 %719
          %v721 = vrot.slane %v720, 4
          %v722 = vadd.f32 %v720, %v721
          %v723 = vrot.slane %v722, 2
          %v724 = vadd.f32 %v722, %v723
          %v725 = vrot.slane %v724, 1
          %v726 = vadd.f32 %v724, %v725
          %s727 = vtos %v726
          %v728 = vstv %s727
          %v729 = vsel %vm715, %v728, 0.0
          %vm730 = vcmp.eq.s32.totalorder %v476, 1
          %v731 = vld [vmem:[#allocation3] sm:$0x1]
          %v732 = vsel %vm717, %v731, 0.0
          %733 = vadd.xlane.f32.xlu0 %v732
          %v734 = vpop.xlane.xlu0 %733
          %v735 = vrot.slane %v734, 4
          %v736 = vadd.f32 %v734, %v735
          %v737 = vrot.slane %v736, 2
          %v738 = vadd.f32 %v736, %v737
          %v739 = vrot.slane %v738, 1
          %v740 = vadd.f32 %v738, %v739
          %s741 = vtos %v740
          %v742 = vstv %s741
          %v743 = vsel %vm730, %v742, 0.0
          %v744 = vadd.f32 %v729, %v743
          %vm745 = vcmp.eq.s32.totalorder %v476, 2
          %v746 = vld [vmem:[#allocation4] sm:$0x1]
          %v747 = vsel %vm717, %v746, 0.0
          %748 = vadd.xlane.f32.xlu0 %v747
          %v749 = vpop.xlane.xlu0 %748
          %v750 = vrot.slane %v749, 4
          %v751 = vadd.f32 %v749, %v750
          %v752 = vrot.slane %v751, 2
          %v753 = vadd.f32 %v751, %v752
          %v754 = vrot.slane %v753, 1
          %v755 = vadd.f32 %v753, %v754
          %s756 = vtos %v755
          %v757 = vstv %s756
          %v758 = vsel %vm745, %v757, 0.0
          %v759 = vadd.f32 %v744, %v758
          %vm760 = vcmp.eq.s32.totalorder %v476, 3
          %v761 = vld [vmem:[#allocation5] sm:$0x1]
          %v762 = vsel %vm717, %v761, 0.0
          %763 = vadd.xlane.f32.xlu0 %v762
          %v764 = vpop.xlane.xlu0 %763
          %v765 = vrot.slane %v764, 4
          %v766 = vadd.f32 %v764, %v765
          %v767 = vrot.slane %v766, 2
          %v768 = vadd.f32 %v766, %v767
          %v769 = vrot.slane %v768, 1
          %v770 = vadd.f32 %v768, %v769
          %s771 = vtos %v770
          %v772 = vstv %s771
          %v773 = vsel %vm760, %v772, 0.0
          %v774 = vadd.f32 %v759, %v773
          %775 = vst [vmem:[%s436] sm:$0x1] %v774
        $region94: #{tpu_custom_call.1} parent=77 // pred_fallthru
          _
        %s776 = sand.u32 %s211, 1
        %s777 = scalar_lea.sflag [#allocation9], %s776
        %s778 = sand.u32 %s211, 1
        %s779 = scalar_lea.vmem [#allocation10], %s778
        // Predicated region
        $region95: #{tpu_custom_call.1} parent=77 // pred_check
          %p780 = pneg %p221
        $region96: #{tpu_custom_call.1} parent=77 // pred_check_branch
          %782 = sbr.rel (%p780) target = $region98
        $region97: #{tpu_custom_call.1} parent=77 // pred_region
          %784 = vsyncadd %s777, 0
          %s785 = scalar_lea.hbm %s6, %s27
          %s787 = sshll.u32 %s779, 4
          %s788 = int_to_ptr.vmem [resolvable:$true] %s787
          %s789 = sshll.u32 %s785, 4
          %s790 = int_to_ptr.hbm [resolvable:$true] %s789
          %792 = dma.vmem_to_hbm [thread:$0]  %s788, 16, %s790, %s777
        $region98: #{tpu_custom_call.1} parent=77 // pred_fallthru
          _
      $region78: #{tpu_custom_call.1} parent=5 // pred_fallthru
        _
      %p793 = scmp.le.s32.totalorder 2, %s18
      // Predicated region
      $region99: #{tpu_custom_call.1} parent=5 // pred_check
        %p794 = pneg %p793
      $region100: #{tpu_custom_call.1} parent=5 // pred_check_branch
        %796 = sbr.rel (%p794) target = $region102
      $region101: #{tpu_custom_call.1} parent=5 // pred_region
        %s797 = ssub.s32 %s18, 2
        // Predicated region
        $region103: #{tpu_custom_call.1} parent=101 // pred_check
          %p798 = pneg %p227
        $region104: #{tpu_custom_call.1} parent=101 // pred_check_branch
          %800 = sbr.rel (%p798) target = $region106
        $region105: #{tpu_custom_call.1} parent=101 // pred_region
          %s801 = sand.u32 %s212, 1
          %s802 = scalar_lea.sflag [#allocation9], %s801
          %s803 = sand.u32 %s212, 1
          %s804 = scalar_lea.vmem [#allocation10], %s803
          %806 = dma.done %s802, 16
        $region106: #{tpu_custom_call.1} parent=101 // pred_fallthru
          _
      $region102: #{tpu_custom_call.1} parent=5 // pred_fallthru
        _
    $region6: #{tpu_custom_call.1} parent=1 // loop_footer
      %s22 = sadd.s32 1, %s18
    $region7: #{tpu_custom_call.1} parent=1 // loop_footer_branch
      %17 = sbr.rel target = $region3
    $region8: #{tpu_custom_call.1} parent=1 // loop_exit
      _
    %807 = vsyncpa [#allocation8], 1
    %s808 = scalar_lea.sflag [#allocation8], 1
    %809 = vsyncpa %s808, 1
    %810 = vsyncpa [#allocation9], 1
    %s811 = scalar_lea.sflag [#allocation9], 1
    %812 = vsyncpa %s811, 1

</llo_original>
